<compile_context>
chip_gen: v5e
topology: v5e:2x2
jax: 0.10.0
libtpu: 0.0.40
codegen_flags: <defaults>
</compile_context>

<pallas_src>
import jax
import jax.numpy as jnp
from jax.experimental import pallas as pl
from jax.experimental.pallas import tpu as pltpu


# --------------------------------------------------------------------------
# Kernel body: fused elementwise multiply-add; fraction blocks (1, 1, TW)
# broadcast over the channel (sublane) axis of the (1, TC, TW) embedding
# blocks.  Arithmetic runs in f32 (or the output dtype if non-floating).
# --------------------------------------------------------------------------
def _area_weighted_sum_kernel(sea_e_ref, land_e_ref, ice_e_ref,
                              sea_f_ref, land_f_ref, ice_f_ref,
                              out_ref):
    out_dtype = out_ref.dtype
    if jnp.issubdtype(out_dtype, jnp.floating):
        cd = jnp.promote_types(out_dtype, jnp.float32)
    else:
        cd = out_dtype
    acc = (sea_e_ref[...].astype(cd) * sea_f_ref[...].astype(cd)
           + land_e_ref[...].astype(cd) * land_f_ref[...].astype(cd)
           + ice_e_ref[...].astype(cd) * ice_f_ref[...].astype(cd))
    out_ref[...] = acc.astype(out_dtype)


# --------------------------------------------------------------------------
# Hardware / sizing helpers.
# --------------------------------------------------------------------------
def _round_up(x, m):
    return ((x + m - 1) // m) * m


def _round_down_128(x):
    return max(128, (x // 128) * 128)


def _sublane(dtype):
    """Second-minor packing granularity in VMEM: f32->8, bf16->16, int8->32."""
    itemsize = jnp.dtype(dtype).itemsize
    return max(8, 32 // max(1, itemsize))


def _vmem_capacity_and_is_v5():
    """Per-core VMEM capacity and a best-effort v5-generation flag."""
    vmem = 64 << 20          # conservative default = v7x per-TensorCore
    is_v5 = False
    try:
        info = pltpu.get_tpu_info()
        vmem = int(getattr(info, "vmem_capacity_bytes", vmem))
        ver = str(getattr(info, "chip_version", "")).lower()
        is_v5 = "v5" in ver or "5e" in ver or "5p" in ver
    except Exception:
        pass
    return vmem, is_v5


def _tile_cap_bytes(vmem_capacity, is_v5):
    """Per-embedding-tile byte cap, generation aware."""
    if is_v5:
        return 3 << 20            # v5e: ~820 GB/s HBM, overhead already <3%
    if vmem_capacity >= (96 << 20):
        return 10 << 20           # v5e/v6e-class 128 MiB VMEM
    return 5 << 20                # v7x: 64 MiB per TensorCore


def _choose_tiles(C, L, emb_dtypes, out_dtype, tile_cap):
    """Pick lane-dense (TC, TW) respecting the (8, 128) block rule, with the
    sublane-*padded* tile kept under tile_cap.  Prefer keeping the full C in
    one tile (single C grid step => trivial fraction reuse); when C is tiny,
    grow TW rather than TC."""
    isz = max([jnp.dtype(d).itemsize for d in emb_dtypes]
              + [jnp.dtype(out_dtype).itemsize])
    tc_align = max([_sublane(d) for d in emb_dtypes] + [_sublane(out_dtype)])

    padded_full_c = _round_up(C, tc_align)
    tw_cap_full_c = _round_down_128(max(128, tile_cap // (padded_full_c * isz)))

    if tile_cap // (padded_full_c * isz) >= 512:
        # Full C fits comfortably: take all channels, widen the lane axis.
        tc = C
        tw = L if L <= tw_cap_full_c else tw_cap_full_c
    else:
        # C is large: tile it; keep TW at a solid lane width.
        tw = L if L <= 2048 else 2048
        max_tc = max(1, tile_cap // max(1, tw * isz))
        if C <= max_tc:
            tc = C
        else:
            tc = max(tc_align, (max_tc // tc_align) * tc_align)
    return tc, tw


# --------------------------------------------------------------------------
# Public wrapper: Pallas implementation of AreaWeightedSum.forward.
#   sea/land/ice_embedding: (B, C, H, W)
#   sea/land/ice_fraction:  (B, 1, H, W)   (broadcast over C, as in PyTorch)
# --------------------------------------------------------------------------
def area_weighted_sum(sea_embedding, land_embedding, ice_embedding,
                      sea_fraction, land_fraction, ice_fraction):
    B, C, H, W = sea_embedding.shape
    assert land_embedding.shape == (B, C, H, W)
    assert ice_embedding.shape == (B, C, H, W)
    for f in (sea_fraction, land_fraction, ice_fraction):
        assert f.shape == (B, 1, H, W)

    HW = H * W
    embeddings = (sea_embedding, land_embedding, ice_embedding)
    fractions = (sea_fraction, land_fraction, ice_fraction)
    out_dtype = jnp.result_type(*embeddings, *fractions)  # PyTorch promotion

    # Layout: lane-dense flattened spatial axis.  If HW < 128 the lane axis
    # would be below a vreg row and stores would degrade to masked vst.msk,
    # so fold C into the lane axis instead (fractions broadcast first — only
    # happens for tiny tensors, so the extra fraction traffic is negligible).
    if HW >= 128 or C == 1:
        C_eff, L = C, HW
        embs = [x.reshape(B, C_eff, L) for x in embeddings]
        fracs = [f.reshape(B, 1, L) for f in fractions]
    else:
        C_eff, L = 1, C * HW
        embs = [x.reshape(B, 1, L) for x in embeddings]
        fracs = [jnp.broadcast_to(f, (B, C, HW)).reshape(B, 1, L)
                 for f in fractions]

    emb_dtypes = [x.dtype for x in embs]
    frac_dtypes = [f.dtype for f in fracs]

    vmem_cap, is_v5 = _vmem_capacity_and_is_v5()
    tile_cap = _tile_cap_bytes(vmem_cap, is_v5)
    TC, TW = _choose_tiles(C_eff, L, emb_dtypes, out_dtype, tile_cap)

    # Megacore guard (v7x: 2 TCs/chip): make sure the parallel grid axes
    # (B, HW-tiles) provide >= 2 iterations when the data allows it.
    n_w = pl.cdiv(L, TW)
    if B * n_w < 2 and TW > 128:
        half = _round_down_128(TW // 2)
        if half < TW and pl.cdiv(L, half) >= 2:
            TW = half
            n_w = pl.cdiv(L, TW)
    n_c = pl.cdiv(C_eff, TC)

    grid = (B, n_w, n_c)  # C-tiles innermost => fraction block DMA elided

    emb_spec = pl.BlockSpec((1, TC, TW), lambda b, w, c: (b, c, w))
    frac_spec = pl.BlockSpec((1, 1, TW), lambda b, w, c: (b, 0, w))
    out_spec = pl.BlockSpec((1, TC, TW), lambda b, w, c: (b, c, w))

    # VMEM budget: sublane-padded tiles, double-buffered (3 emb + 1 out + 3
    # frac), with headroom, capped below the physical per-core VMEM.
    emb_tile_bytes = sum(_round_up(TC, _sublane(d)) * TW * jnp.dtype(d).itemsize
                         for d in emb_dtypes)
    out_tile_bytes = (_round_up(TC, _sublane(out_dtype)) * TW
                      * jnp.dtype(out_dtype).itemsize)
    frac_tile_bytes = sum(_sublane(d) * TW * jnp.dtype(d).itemsize
                          for d in frac_dtypes)
    need = 2 * (emb_tile_bytes + out_tile_bytes + frac_tile_bytes)
    vmem_limit = int(min(max(2 * need, 32 << 20), int(vmem_cap * 0.82)))
    vmem_limit = max(vmem_limit, need + (2 << 20))

    in_bytes = sum(int(x.size) * jnp.dtype(x.dtype).itemsize
                   for x in (embs + fracs))
    out_bytes = B * C_eff * L * jnp.dtype(out_dtype).itemsize
    cost = pl.CostEstimate(
        flops=5 * B * C * HW,        # 3 mul + 2 add per output element
        transcendentals=0,
        bytes_accessed=in_bytes + out_bytes,
    )

    out_flat = pl.pallas_call(
        _area_weighted_sum_kernel,
        out_shape=jax.ShapeDtypeStruct((B, C_eff, L), out_dtype),
        grid=grid,
        in_specs=[emb_spec, emb_spec, emb_spec,
                  frac_spec, frac_spec, frac_spec],
        out_specs=out_spec,
        compiler_params=pltpu.CompilerParams(
            # B and HW-tile axes are megacore-shardable; keep the C loop
            # sequential per core so the fraction DMA is elided per (b, w).
            dimension_semantics=("parallel", "parallel", "arbitrary"),
            vmem_limit_bytes=vmem_limit,
        ),
        cost_estimate=cost,
    )(*embs, *fracs)

    return out_flat.reshape(B, C, H, W)


def _reference(sea_e, land_e, ice_e, sea_f, land_f, ice_f):
    return sea_e * sea_f + land_e * land_f + ice_e * ice_f


if __name__ == "__main__":
    key = jax.random.PRNGKey(0)
    B, C, H, W = 2, 4, 16, 16
    k = jax.random.split(key, 4)

    sea_e = jax.random.normal(k[0], (B, C, H, W), dtype=jnp.float32)
    land_e = jax.random.normal(k[1], (B, C, H, W), dtype=jnp.float32)
    ice_e = jax.random.normal(k[2], (B, C, H, W), dtype=jnp.float32)

    # Fractions: non-negative, sum to 1 per pixel (softmax over surface type).
    raw = jax.random.normal(k[3], (B, 3, 1, H, W), dtype=jnp.float32)
    fr = jax.nn.softmax(raw, axis=1)
    sea_f, land_f, ice_f = fr[:, 0], fr[:, 1], fr[:, 2]

    out = area_weighted_sum(sea_e, land_e, ice_e, sea_f, land_f, ice_f)
    out = jax.block_until_ready(out)

    ref = _reference(sea_e, land_e, ice_e, sea_f, land_f, ice_f)
    assert out.shape == (B, C, H, W)
    assert out.dtype == ref.dtype
    assert jnp.allclose(out, ref, atol=1e-6, rtol=1e-6)

    print("KERNEL_OK")
</pallas_src>

<mosaic_0001>
module attributes {stable_mosaic.version = 11 : i64} {
  func.func @_area_weighted_sum_kernel(%arg0: i32, %arg1: i32, %arg2: i32, %arg3: memref<1x4x256xf32, #tpu.memory_space<vmem>>, %arg4: memref<1x4x256xf32, #tpu.memory_space<vmem>>, %arg5: memref<1x4x256xf32, #tpu.memory_space<vmem>>, %arg6: memref<1x1x256xf32, #tpu.memory_space<vmem>>, %arg7: memref<1x1x256xf32, #tpu.memory_space<vmem>>, %arg8: memref<1x1x256xf32, #tpu.memory_space<vmem>>, %arg9: memref<1x4x256xf32, #tpu.memory_space<vmem>>) attributes {dimension_semantics = [#tpu.dimension_semantics<parallel>, #tpu.dimension_semantics<parallel>, #tpu.dimension_semantics<arbitrary>], iteration_bounds = array<i64: 2, 1, 1>, scalar_prefetch = 0 : i64, scratch_operands = 0 : i64, tpu.core_type = #tpu.core_type<tc>, window_params = [{transform_indices = @transform_0, window_bounds = array<i64: 1, 4, 256>}, {transform_indices = @transform_1, window_bounds = array<i64: 1, 4, 256>}, {transform_indices = @transform_2, window_bounds = array<i64: 1, 4, 256>}, {transform_indices = @transform_3, window_bounds = array<i64: 1, 1, 256>}, {transform_indices = @transform_4, window_bounds = array<i64: 1, 1, 256>}, {transform_indices = @transform_5, window_bounds = array<i64: 1, 1, 256>}, {transform_indices = @transform_6, window_bounds = array<i64: 1, 4, 256>}]} {
    %c0 = arith.constant 0 : index
    %c0_0 = arith.constant 0 : index
    %c0_1 = arith.constant 0 : index
    %0 = vector.load %arg3[%c0, %c0_0, %c0_1] : memref<1x4x256xf32, #tpu.memory_space<vmem>>, vector<1x4x256xf32>
    %c0_2 = arith.constant 0 : index
    %c0_3 = arith.constant 0 : index
    %c0_4 = arith.constant 0 : index
    %1 = vector.load %arg6[%c0_2, %c0_3, %c0_4] : memref<1x1x256xf32, #tpu.memory_space<vmem>>, vector<1x1x256xf32>
    %2 = vector.broadcast %1 : vector<1x1x256xf32> to vector<1x4x256xf32>
    %3 = arith.mulf %0, %2 : vector<1x4x256xf32>
    %c0_5 = arith.constant 0 : index
    %c0_6 = arith.constant 0 : index
    %c0_7 = arith.constant 0 : index
    %4 = vector.load %arg4[%c0_5, %c0_6, %c0_7] : memref<1x4x256xf32, #tpu.memory_space<vmem>>, vector<1x4x256xf32>
    %c0_8 = arith.constant 0 : index
    %c0_9 = arith.constant 0 : index
    %c0_10 = arith.constant 0 : index
    %5 = vector.load %arg7[%c0_8, %c0_9, %c0_10] : memref<1x1x256xf32, #tpu.memory_space<vmem>>, vector<1x1x256xf32>
    %6 = vector.broadcast %5 : vector<1x1x256xf32> to vector<1x4x256xf32>
    %7 = arith.mulf %4, %6 : vector<1x4x256xf32>
    %8 = arith.addf %3, %7 : vector<1x4x256xf32>
    %c0_11 = arith.constant 0 : index
    %c0_12 = arith.constant 0 : index
    %c0_13 = arith.constant 0 : index
    %9 = vector.load %arg5[%c0_11, %c0_12, %c0_13] : memref<1x4x256xf32, #tpu.memory_space<vmem>>, vector<1x4x256xf32>
    %c0_14 = arith.constant 0 : index
    %c0_15 = arith.constant 0 : index
    %c0_16 = arith.constant 0 : index
    %10 = vector.load %arg8[%c0_14, %c0_15, %c0_16] : memref<1x1x256xf32, #tpu.memory_space<vmem>>, vector<1x1x256xf32>
    %11 = vector.broadcast %10 : vector<1x1x256xf32> to vector<1x4x256xf32>
    %12 = arith.mulf %9, %11 : vector<1x4x256xf32>
    %13 = arith.addf %8, %12 : vector<1x4x256xf32>
    %c0_17 = arith.constant 0 : index
    %c0_18 = arith.constant 0 : index
    %c0_19 = arith.constant 0 : index
    %14 = vector.load %arg9[%c0_17, %c0_18, %c0_19] : memref<1x4x256xf32, #tpu.memory_space<vmem>>, vector<1x4x256xf32>
    tpu.vector_store %arg9[%c0_17, %c0_18, %c0_19], %13 {strides = array<i32>} : memref<1x4x256xf32, #tpu.memory_space<vmem>>, vector<1x4x256xf32>,
    return
  }
  func.func @transform_0(%arg0: i32, %arg1: i32, %arg2: i32) -> (i32, i32, i32) {
    %c0_i32 = arith.constant 0 : i32
    return %arg0, %arg2, %arg1 : i32, i32, i32
  }
  func.func @transform_1(%arg0: i32, %arg1: i32, %arg2: i32) -> (i32, i32, i32) {
    %c0_i32 = arith.constant 0 : i32
    return %arg0, %arg2, %arg1 : i32, i32, i32
  }
  func.func @transform_2(%arg0: i32, %arg1: i32, %arg2: i32) -> (i32, i32, i32) {
    %c0_i32 = arith.constant 0 : i32
    return %arg0, %arg2, %arg1 : i32, i32, i32
  }
  func.func @transform_3(%arg0: i32, %arg1: i32, %arg2: i32) -> (i32, i32, i32) {
    %c0_i32 = arith.constant 0 : i32
    %c0_i32_0 = arith.constant 0 : i32
    return %arg0, %c0_i32, %arg1 : i32, i32, i32
  }
  func.func @transform_4(%arg0: i32, %arg1: i32, %arg2: i32) -> (i32, i32, i32) {
    %c0_i32 = arith.constant 0 : i32
    %c0_i32_0 = arith.constant 0 : i32
    return %arg0, %c0_i32, %arg1 : i32, i32, i32
  }
  func.func @transform_5(%arg0: i32, %arg1: i32, %arg2: i32) -> (i32, i32, i32) {
    %c0_i32 = arith.constant 0 : i32
    %c0_i32_0 = arith.constant 0 : i32
    return %arg0, %c0_i32, %arg1 : i32, i32, i32
  }
  func.func @transform_6(%arg0: i32, %arg1: i32, %arg2: i32) -> (i32, i32, i32) {
    %c0_i32 = arith.constant 0 : i32
    return %arg0, %arg2, %arg1 : i32, i32, i32
  }
}

</mosaic_0001>

<llo_original>
// kernel: tpu_custom_call.1
$region0: #{tpu_custom_call.1}
  #allocation0 [shape = 'u32[]', space=smem, size = 0x4, offset = 0x4, fixed_abs, tag = 'smem constant byte address 0x4 - core index']
  #allocation1 [shape = 'u32[72,128]{1,0:T(1,128)}', space=vmem, size = 0x9000, scoped, tag = 'internal scratch']
  %s0 = inlined_call_operand.hbm [shape: f32[2,4,256], index: 0, kind: input, shape index: {}]
  %s1 = inlined_call_operand.hbm [shape: f32[2,4,256], index: 1, kind: input, shape index: {}]
  %s2 = inlined_call_operand.hbm [shape: f32[2,4,256], index: 2, kind: input, shape index: {}]
  %s3 = inlined_call_operand.hbm [shape: f32[2,1,256], index: 3, kind: input, shape index: {}]
  %s4 = inlined_call_operand.hbm [shape: f32[2,1,256], index: 4, kind: input, shape index: {}]
  %s5 = inlined_call_operand.vmem [shape: f32[2,1,256], index: 5, kind: input, shape index: {}]
  %s6 = inlined_call_operand.hbm [shape: f32[2,4,256], index: 6, kind: output, shape index: {}]
  %s7 = sld [smem:[#allocation0]]
  $region77: #{tpu_custom_call.1} parent=0
    _
  %s9 = ssub.s32 1, %s7
  %s10 = scalar_select 0, %s9, %s7
  $region1: #{tpu_custom_call.1} parent=0
    #allocation2 [shape = 'u8[8192]{0}', space=vmem, size = 0x2000, scoped, tag = 'input window, operand 0']
    #allocation3 [shape = 's32[2]{0}', space=sflag, size = 0x8, scoped, tag = 'scoped memory for tpu_custom_call.1']
    #allocation4 [shape = 's32[2]{0}', space=sflag, size = 0x8, scoped, tag = 'scoped memory for tpu_custom_call.1']
    #allocation5 [shape = 'u8[8192]{0}', space=vmem, size = 0x2000, scoped, tag = 'input window, operand 1']
    #allocation6 [shape = 's32[2]{0}', space=sflag, size = 0x8, scoped, tag = 'scoped memory for tpu_custom_call.1']
    #allocation7 [shape = 'u8[8192]{0}', space=vmem, size = 0x2000, scoped, tag = 'input window, operand 2']
    #allocation8 [shape = 'u8[2048]{0}', space=vmem, size = 0x800, scoped, tag = 'input window, operand 3']
    #allocation9 [shape = 's32[2]{0}', space=sflag, size = 0x8, scoped, tag = 'scoped memory for tpu_custom_call.1']
    #allocation10 [shape = 'u8[2048]{0}', space=vmem, size = 0x800, scoped, tag = 'input window, operand 4']
    #allocation11 [shape = 'u8[8192]{0}', space=vmem, size = 0x2000, scoped, tag = 'output window, operand 0']
    %11 = vsyncpa [#allocation3], 0
    %s12 = scalar_lea.sflag [#allocation3], 1
    %13 = vsyncpa %s12, 0
    %14 = vsyncpa [#allocation6], 0
    %s15 = scalar_lea.sflag [#allocation6], 1
    %16 = vsyncpa %s15, 0
    %17 = vsyncpa [#allocation9], 0
    %s18 = scalar_lea.sflag [#allocation9], 1
    %19 = vsyncpa %s18, 0
    %20 = vsyncpa [#allocation4], 0
    %s21 = scalar_lea.sflag [#allocation4], 1
    %22 = vsyncpa %s21, 0
    loop: start=0, step=1, limit=4
    $region2: #{tpu_custom_call.1} parent=1 // loop_pre_header
      _
    $region3: #{tpu_custom_call.1} parent=1 // loop_header
      %s24 = sphi 0, %s28
      %p25 = scmp.ge.s32.totalorder %s24, 4
      %s31 = sphi 0, %s50
      %s32 = sphi 0, %s46
      %s33 = sphi 0, %s42
      %s34 = sphi 0, %s31
      %s35 = sphi 0, %s32
      %s36 = sphi 0, %s33
      %s37 = sphi 0, %s34
      %s38 = sphi 0, %s35
      %s39 = sphi 0, %s36
      %s57 = sphi 0, %s59
      %s60 = sphi 0, %s57
      %s61 = sphi 0, %s60
      %s77 = sphi 0, %s61
      %s87 = sphi 0, %s89
      %s90 = sphi 0, %s87
      %s91 = sphi 0, %s90
      %s107 = sphi 0, %s91
      %s117 = sphi 0, %s119
      %s120 = sphi 0, %s117
      %s121 = sphi 0, %s120
      %s137 = sphi 0, %s121
      %s145 = sphi 0, %s147
      %s148 = sphi 0, %s145
      %s149 = sphi 0, %s148
      %s165 = sphi 0, %s149
      %s173 = sphi 0, %s175
      %s176 = sphi 0, %s173
      %s177 = sphi 0, %s176
      %s193 = sphi 0, %s177
      %s201 = sphi 0, %s203
      %s204 = sphi 0, %s201
      %s205 = sphi 0, %s204
      %s221 = sphi 0, %s205
      %s231 = sphi 0, %s233
      %s234 = sphi 0, %s231
      %s235 = sphi 0, %s234
      %s251 = sphi 0, %s235
    $region4: #{tpu_custom_call.1} parent=1 // loop_header_branch
      %27 = sbr.rel (%p25) target = $region8
    $region5: #{tpu_custom_call.1} parent=1 // loop_body
      %s29 = ssub.s32 %s24, 1
      %s30 = ssub.s32 %s24, 2
      %s40 = sadd.s32 1, %s33
      %p41 = scmp.ge.s32.totalorder %s40, 1
      %s42 = scalar_select %p41, 0, %s40
      %s43 = sadd.s32 1, %s32
      %s44 = scalar_select %p41, %s43, %s32
      %p45 = scmp.ge.s32.totalorder %s44, 1
      %s46 = scalar_select %p45, 0, %s44
      %s47 = sadd.s32 1, %s31
      %s48 = scalar_select %p45, %s47, %s31
      %p49 = scmp.ge.s32.totalorder %s48, 2
      %s50 = scalar_select %p49, 0, %s48
      %s51 = ssub.s32 %s31, %s50
      %s52 = ssub.s32 %s33, %s42
      %s53 = sor.u32 %s51, %s52
      %s54 = ssub.s32 %s32, %s46
      %s55 = sor.u32 %s53, %s54
      %p56 = scmp.eq.s32.totalorder %s55, 0
      %s58 = sadd.s32 %s57, 1
      %s59 = scalar_select %p56, %s57, %s58
      %p62 = pneg %p56
      %p63 = scmp.eq.s32.totalorder %s24, 1
      %p64 = por %p62, %p63
      %p65 = scmp.ne.s32.totalorder %s57, %s60
      %p66 = scmp.eq.s32.totalorder %s24, 0
      %p67 = por %p65, %p66
      %p68 = scmp.ne.s32.totalorder %s57, %s60
      %p69 = scmp.eq.s32.totalorder %s29, 1
      %p70 = por %p68, %p69
      %p71 = scmp.ne.s32.totalorder %s60, %s61
      %p72 = scmp.eq.s32.totalorder %s29, 0
      %p73 = por %p71, %p72
      %p74 = scmp.ne.s32.totalorder %s60, %s61
      %p75 = scmp.eq.s32.totalorder %s30, 1
      %p76 = por %p74, %p75
      %p78 = scmp.ne.s32.totalorder %s61, %s77
      %p79 = scmp.eq.s32.totalorder %s30, 0
      %p80 = por %p78, %p79
      %s81 = ssub.s32 %s31, %s50
      %s82 = ssub.s32 %s33, %s42
      %s83 = sor.u32 %s81, %s82
      %s84 = ssub.s32 %s32, %s46
      %s85 = sor.u32 %s83, %s84
      %p86 = scmp.eq.s32.totalorder %s85, 0
      %s88 = sadd.s32 %s87, 1
      %s89 = scalar_select %p86, %s87, %s88
      %p92 = pneg %p86
      %p93 = scmp.eq.s32.totalorder %s24, 1
      %p94 = por %p92, %p93
      %p95 = scmp.ne.s32.totalorder %s87, %s90
      %p96 = scmp.eq.s32.totalorder %s24, 0
      %p97 = por %p95, %p96
      %p98 = scmp.ne.s32.totalorder %s87, %s90
      %p99 = scmp.eq.s32.totalorder %s29, 1
      %p100 = por %p98, %p99
      %p101 = scmp.ne.s32.totalorder %s90, %s91
      %p102 = scmp.eq.s32.totalorder %s29, 0
      %p103 = por %p101, %p102
      %p104 = scmp.ne.s32.totalorder %s90, %s91
      %p105 = scmp.eq.s32.totalorder %s30, 1
      %p106 = por %p104, %p105
      %p108 = scmp.ne.s32.totalorder %s91, %s107
      %p109 = scmp.eq.s32.totalorder %s30, 0
      %p110 = por %p108, %p109
      %s111 = ssub.s32 %s31, %s50
      %s112 = ssub.s32 %s33, %s42
      %s113 = sor.u32 %s111, %s112
      %s114 = ssub.s32 %s32, %s46
      %s115 = sor.u32 %s113, %s114
      %p116 = scmp.eq.s32.totalorder %s115, 0
      %s118 = sadd.s32 %s117, 1
      %s119 = scalar_select %p116, %s117, %s118
      %p122 = pneg %p116
      %p123 = scmp.eq.s32.totalorder %s24, 1
      %p124 = por %p122, %p123
      %p125 = scmp.ne.s32.totalorder %s117, %s120
      %p126 = scmp.eq.s32.totalorder %s24, 0
      %p127 = por %p125, %p126
      %p128 = scmp.ne.s32.totalorder %s117, %s120
      %p129 = scmp.eq.s32.totalorder %s29, 1
      %p130 = por %p128, %p129
      %p131 = scmp.ne.s32.totalorder %s120, %s121
      %p132 = scmp.eq.s32.totalorder %s29, 0
      %p133 = por %p131, %p132
      %p134 = scmp.ne.s32.totalorder %s120, %s121
      %p135 = scmp.eq.s32.totalorder %s30, 1
      %p136 = por %p134, %p135
      %p138 = scmp.ne.s32.totalorder %s121, %s137
      %p139 = scmp.eq.s32.totalorder %s30, 0
      %p140 = por %p138, %p139
      %s141 = ssub.s32 %s31, %s50
      %s142 = ssub.s32 %s32, %s46
      %s143 = sor.u32 %s141, %s142
      %p144 = scmp.eq.s32.totalorder %s143, 0
      %s146 = sadd.s32 %s145, 1
      %s147 = scalar_select %p144, %s145, %s146
      %p150 = pneg %p144
      %p151 = scmp.eq.s32.totalorder %s24, 1
      %p152 = por %p150, %p151
      %p153 = scmp.ne.s32.totalorder %s145, %s148
      %p154 = scmp.eq.s32.totalorder %s24, 0
      %p155 = por %p153, %p154
      %p156 = scmp.ne.s32.totalorder %s145, %s148
      %p157 = scmp.eq.s32.totalorder %s29, 1
      %p158 = por %p156, %p157
      %p159 = scmp.ne.s32.totalorder %s148, %s149
      %p160 = scmp.eq.s32.totalorder %s29, 0
      %p161 = por %p159, %p160
      %p162 = scmp.ne.s32.totalorder %s148, %s149
      %p163 = scmp.eq.s32.totalorder %s30, 1
      %p164 = por %p162, %p163
      %p166 = scmp.ne.s32.totalorder %s149, %s165
      %p167 = scmp.eq.s32.totalorder %s30, 0
      %p168 = por %p166, %p167
      %s169 = ssub.s32 %s31, %s50
      %s170 = ssub.s32 %s32, %s46
      %s171 = sor.u32 %s169, %s170
      %p172 = scmp.eq.s32.totalorder %s171, 0
      %s174 = sadd.s32 %s173, 1
      %s175 = scalar_select %p172, %s173, %s174
      %p178 = pneg %p172
      %p179 = scmp.eq.s32.totalorder %s24, 1
      %p180 = por %p178, %p179
      %p181 = scmp.ne.s32.totalorder %s173, %s176
      %p182 = scmp.eq.s32.totalorder %s24, 0
      %p183 = por %p181, %p182
      %p184 = scmp.ne.s32.totalorder %s173, %s176
      %p185 = scmp.eq.s32.totalorder %s29, 1
      %p186 = por %p184, %p185
      %p187 = scmp.ne.s32.totalorder %s176, %s177
      %p188 = scmp.eq.s32.totalorder %s29, 0
      %p189 = por %p187, %p188
      %p190 = scmp.ne.s32.totalorder %s176, %s177
      %p191 = scmp.eq.s32.totalorder %s30, 1
      %p192 = por %p190, %p191
      %p194 = scmp.ne.s32.totalorder %s177, %s193
      %p195 = scmp.eq.s32.totalorder %s30, 0
      %p196 = por %p194, %p195
      %s197 = ssub.s32 %s31, %s50
      %s198 = ssub.s32 %s32, %s46
      %s199 = sor.u32 %s197, %s198
      %p200 = scmp.eq.s32.totalorder %s199, 0
      %s202 = sadd.s32 %s201, 1
      %s203 = scalar_select %p200, %s201, %s202
      %p206 = pneg %p200
      %p207 = scmp.eq.s32.totalorder %s24, 1
      %p208 = por %p206, %p207
      %p209 = scmp.ne.s32.totalorder %s201, %s204
      %p210 = scmp.eq.s32.totalorder %s24, 0
      %p211 = por %p209, %p210
      %p212 = scmp.ne.s32.totalorder %s201, %s204
      %p213 = scmp.eq.s32.totalorder %s29, 1
      %p214 = por %p212, %p213
      %p215 = scmp.ne.s32.totalorder %s204, %s205
      %p216 = scmp.eq.s32.totalorder %s29, 0
      %p217 = por %p215, %p216
      %p218 = scmp.ne.s32.totalorder %s204, %s205
      %p219 = scmp.eq.s32.totalorder %s30, 1
      %p220 = por %p218, %p219
      %p222 = scmp.ne.s32.totalorder %s205, %s221
      %p223 = scmp.eq.s32.totalorder %s30, 0
      %p224 = por %p222, %p223
      %s225 = ssub.s32 %s31, %s50
      %s226 = ssub.s32 %s33, %s42
      %s227 = sor.u32 %s225, %s226
      %s228 = ssub.s32 %s32, %s46
      %s229 = sor.u32 %s227, %s228
      %p230 = scmp.eq.s32.totalorder %s229, 0
      %s232 = sadd.s32 %s231, 1
      %s233 = scalar_select %p230, %s231, %s232
      %p236 = pneg %p230
      %p237 = scmp.eq.s32.totalorder %s24, 1
      %p238 = por %p236, %p237
      %p239 = scmp.ne.s32.totalorder %s231, %s234
      %p240 = scmp.eq.s32.totalorder %s24, 0
      %p241 = por %p239, %p240
      %p242 = scmp.ne.s32.totalorder %s231, %s234
      %p243 = scmp.eq.s32.totalorder %s29, 1
      %p244 = por %p242, %p243
      %p245 = scmp.ne.s32.totalorder %s234, %s235
      %p246 = scmp.eq.s32.totalorder %s29, 0
      %p247 = por %p245, %p246
      %p248 = scmp.ne.s32.totalorder %s234, %s235
      %p249 = scmp.eq.s32.totalorder %s30, 1
      %p250 = por %p248, %p249
      %p252 = scmp.ne.s32.totalorder %s235, %s251
      %p253 = scmp.eq.s32.totalorder %s30, 0
      %p254 = por %p252, %p253
      %p255 = scmp.le.s32.totalorder 1, %s24
      %p256 = scmp.lt.s32.totalorder %s24, 3
      %p257 = pnand %p255, %p256
      %p258 = pneg %p257
      // Predicated region
      $region9: #{tpu_custom_call.1} parent=5 // pred_check
        _
      $region10: #{tpu_custom_call.1} parent=5 // pred_check_branch
        %260 = sbr.rel (%p257) target = $region12
      $region11: #{tpu_custom_call.1} parent=5 // pred_region
        %s261 = ssub.s32 %s24, 1
      $region12: #{tpu_custom_call.1} parent=5 // pred_fallthru
        _
      %p262 = scmp.lt.s32.totalorder %s24, 2
      // Predicated region
      $region13: #{tpu_custom_call.1} parent=5 // pred_check
        %p263 = pneg %p262
      $region14: #{tpu_custom_call.1} parent=5 // pred_check_branch
        %265 = sbr.rel (%p263) target = $region16
      $region15: #{tpu_custom_call.1} parent=5 // pred_region
        // Predicated region
        $region17: #{tpu_custom_call.1} parent=15 // pred_check
          %p266 = pneg %p67
        $region18: #{tpu_custom_call.1} parent=15 // pred_check_branch
          %268 = sbr.rel (%p266) target = $region20
        $region19: #{tpu_custom_call.1} parent=15 // pred_region
          %s269 = sand.u32 %s57, 1
          %s270 = scalar_lea.sflag [#allocation3], %s269
          %s271 = sand.u32 %s57, 1
          %s272 = smul.addr %s271, 8
          %s273 = scalar_lea.vmem [#allocation2], %s272
          %s274 = smul.u32 2, %s32
          %276 = vsyncadd %s270, 0
          %s277 = smul.addr %s33, 2
          %s278 = sadd.s32 %s274, %s277
          %s279 = smul.addr %s31, 2
          %s280 = sadd.s32 %s278, %s279
          %s281 = smul.addr %s280, 4
          %s282 = scalar_lea.hbm %s0, %s281
          %s284 = sshll.u32 %s282, 4
          %s285 = int_to_ptr.hbm [resolvable:$true] %s284
          %s286 = sshll.u32 %s273, 4
          %s287 = int_to_ptr.vmem [resolvable:$true] %s286
          %289 = dma.hbm_to_vmem [thread:$0]  %s285, 128, %s287, %s270
        $region20: #{tpu_custom_call.1} parent=15 // pred_fallthru
          _
        // Predicated region
        $region21: #{tpu_custom_call.1} parent=15 // pred_check
          %p290 = pneg %p97
        $region22: #{tpu_custom_call.1} parent=15 // pred_check_branch
          %292 = sbr.rel (%p290) target = $region24
        $region23: #{tpu_custom_call.1} parent=15 // pred_region
          %s293 = sand.u32 %s24, 1
          %s294 = scalar_lea.sflag [#allocation6], %s293
          %s295 = sand.u32 %s87, 1
          %s296 = smul.addr %s295, 8
          %s297 = scalar_lea.vmem [#allocation5], %s296
          %s298 = smul.u32 2, %s32
          %300 = vsyncadd %s294, 0
          %s301 = smul.addr %s33, 2
          %s302 = sadd.s32 %s298, %s301
          %s303 = smul.addr %s31, 2
          %s304 = sadd.s32 %s302, %s303
          %s305 = smul.addr %s304, 4
          %s306 = scalar_lea.hbm %s1, %s305
          %s308 = sshll.u32 %s306, 4
          %s309 = int_to_ptr.hbm [resolvable:$true] %s308
          %s310 = sshll.u32 %s297, 4
          %s311 = int_to_ptr.vmem [resolvable:$true] %s310
          %313 = dma.hbm_to_vmem [thread:$0]  %s309, 128, %s311, %s294
        $region24: #{tpu_custom_call.1} parent=15 // pred_fallthru
          _
        // Predicated region
        $region25: #{tpu_custom_call.1} parent=15 // pred_check
          %p314 = pneg %p127
        $region26: #{tpu_custom_call.1} parent=15 // pred_check_branch
          %316 = sbr.rel (%p314) target = $region28
        $region27: #{tpu_custom_call.1} parent=15 // pred_region
          %s317 = sand.u32 %s24, 1
          %s318 = scalar_lea.sflag [#allocation6], %s317
          %s319 = sand.u32 %s117, 1
          %s320 = smul.addr %s319, 8
          %s321 = scalar_lea.vmem [#allocation7], %s320
          %s322 = smul.u32 2, %s32
          %324 = vsyncadd %s318, 0
          %s325 = smul.addr %s33, 2
          %s326 = sadd.s32 %s322, %s325
          %s327 = smul.addr %s31, 2
          %s328 = sadd.s32 %s326, %s327
          %s329 = smul.addr %s328, 4
          %s330 = scalar_lea.hbm %s2, %s329
          %s332 = sshll.u32 %s330, 4
          %s333 = int_to_ptr.hbm [resolvable:$true] %s332
          %s334 = sshll.u32 %s321, 4
          %s335 = int_to_ptr.vmem [resolvable:$true] %s334
          %337 = dma.hbm_to_vmem [thread:$0]  %s333, 128, %s335, %s318
        $region28: #{tpu_custom_call.1} parent=15 // pred_fallthru
          _
        // Predicated region
        $region29: #{tpu_custom_call.1} parent=15 // pred_check
          %p338 = pneg %p155
        $region30: #{tpu_custom_call.1} parent=15 // pred_check_branch
          %340 = sbr.rel (%p338) target = $region32
        $region31: #{tpu_custom_call.1} parent=15 // pred_region
          %s341 = sand.u32 %s24, 1
          %s342 = scalar_lea.sflag [#allocation9], %s341
          %s343 = sand.u32 %s145, 1
          %s344 = smul.addr %s343, 2
          %s345 = scalar_lea.vmem [#allocation8], %s344
          %s346 = smul.u32 2, %s32
          %348 = vsyncadd %s342, 0
          %s349 = smul.addr %s31, 2
          %s350 = sadd.s32 %s346, %s349
          %s351 = scalar_lea.hbm %s3, %s350
          %s353 = sshll.u32 %s351, 4
          %s354 = int_to_ptr.hbm [resolvable:$true] %s353
          %s355 = sshll.u32 %s345, 4
          %s356 = int_to_ptr.vmem [resolvable:$true] %s355
          %358 = dma.hbm_to_vmem [thread:$0]  %s354, 32, %s356, %s342
        $region32: #{tpu_custom_call.1} parent=15 // pred_fallthru
          _
        // Predicated region
        $region33: #{tpu_custom_call.1} parent=15 // pred_check
          %p359 = pneg %p183
        $region34: #{tpu_custom_call.1} parent=15 // pred_check_branch
          %361 = sbr.rel (%p359) target = $region36
        $region35: #{tpu_custom_call.1} parent=15 // pred_region
          %s362 = sand.u32 %s24, 1
          %s363 = scalar_lea.sflag [#allocation9], %s362
          %s364 = sand.u32 %s173, 1
          %s365 = smul.addr %s364, 2
          %s366 = scalar_lea.vmem [#allocation10], %s365
          %s367 = smul.u32 2, %s32
          %369 = vsyncadd %s363, 0
          %s370 = smul.addr %s31, 2
          %s371 = sadd.s32 %s367, %s370
          %s372 = scalar_lea.hbm %s4, %s371
          %s374 = sshll.u32 %s372, 4
          %s375 = int_to_ptr.hbm [resolvable:$true] %s374
          %s376 = sshll.u32 %s366, 4
          %s377 = int_to_ptr.vmem [resolvable:$true] %s376
          %379 = dma.hbm_to_vmem [thread:$0]  %s375, 32, %s377, %s363
        $region36: #{tpu_custom_call.1} parent=15 // pred_fallthru
          _
        // Predicated region
        $region37: #{tpu_custom_call.1} parent=15 // pred_check
          %p380 = pneg %p211
        $region38: #{tpu_custom_call.1} parent=15 // pred_check_branch
          %382 = sbr.rel (%p380) target = $region40
        $region39: #{tpu_custom_call.1} parent=15 // pred_region
          %s383 = smul.u32 2, %s32
          %p384 = scmp.lt.s32.totalorder %s31, 1
          %s385 = scalar_select %p384, %s31, 1
          %p386 = scmp.lt.s32.totalorder %s383, 1
          %s387 = scalar_select %p386, %s383, 1
          %s388 = smul.addr %s385, 2
          %s389 = sadd.s32 %s387, %s388
          %s390 = scalar_lea.vmem %s5, %s389
          %s391 = smul.u32 2, %s32
        $region40: #{tpu_custom_call.1} parent=15 // pred_fallthru
          _
      $region16: #{tpu_custom_call.1} parent=5 // pred_fallthru
        _
      %p392 = scmp.le.s32.totalorder 1, %s24
      %p393 = scmp.lt.s32.totalorder %s24, 3
      %p394 = pnand %p392, %p393
      %p395 = pneg %p394
      // Predicated region
      $region41: #{tpu_custom_call.1} parent=5 // pred_check
        _
      $region42: #{tpu_custom_call.1} parent=5 // pred_check_branch
        %397 = sbr.rel (%p394) target = $region44
      $region43: #{tpu_custom_call.1} parent=5 // pred_region
        %s398 = ssub.s32 %s24, 1
        %s399 = sand.u32 %s60, 1
        %s400 = scalar_lea.sflag [#allocation3], %s399
        %s401 = sand.u32 %s60, 1
        %s402 = smul.addr %s401, 8
        %s403 = scalar_lea.vmem [#allocation2], %s402
        // Predicated region
        $region45: #{tpu_custom_call.1} parent=43 // pred_check
          %p404 = pneg %p73
        $region46: #{tpu_custom_call.1} parent=43 // pred_check_branch
          %406 = sbr.rel (%p404) target = $region48
        $region47: #{tpu_custom_call.1} parent=43 // pred_region
          %408 = dma.done %s400, 128
        $region48: #{tpu_custom_call.1} parent=43 // pred_fallthru
          _
        %s409 = sand.u32 %s29, 1
        %s410 = scalar_lea.sflag [#allocation6], %s409
        %s411 = sand.u32 %s90, 1
        %s412 = smul.addr %s411, 8
        %s413 = scalar_lea.vmem [#allocation5], %s412
        // Predicated region
        $region49: #{tpu_custom_call.1} parent=43 // pred_check
          %p414 = pneg %p103
        $region50: #{tpu_custom_call.1} parent=43 // pred_check_branch
          %416 = sbr.rel (%p414) target = $region52
        $region51: #{tpu_custom_call.1} parent=43 // pred_region
          %418 = dma.done %s410, 128
        $region52: #{tpu_custom_call.1} parent=43 // pred_fallthru
          _
        %s419 = sand.u32 %s29, 1
        %s420 = scalar_lea.sflag [#allocation6], %s419
        %s421 = sand.u32 %s120, 1
        %s422 = smul.addr %s421, 8
        %s423 = scalar_lea.vmem [#allocation7], %s422
        // Predicated region
        $region53: #{tpu_custom_call.1} parent=43 // pred_check
          %p424 = pneg %p133
        $region54: #{tpu_custom_call.1} parent=43 // pred_check_branch
          %426 = sbr.rel (%p424) target = $region56
        $region55: #{tpu_custom_call.1} parent=43 // pred_region
          %428 = dma.done %s420, 128
        $region56: #{tpu_custom_call.1} parent=43 // pred_fallthru
          _
        %s429 = sand.u32 %s29, 1
        %s430 = scalar_lea.sflag [#allocation9], %s429
        %s431 = sand.u32 %s148, 1
        %s432 = smul.addr %s431, 2
        %s433 = scalar_lea.vmem [#allocation8], %s432
        // Predicated region
        $region57: #{tpu_custom_call.1} parent=43 // pred_check
          %p434 = pneg %p161
        $region58: #{tpu_custom_call.1} parent=43 // pred_check_branch
          %436 = sbr.rel (%p434) target = $region60
        $region59: #{tpu_custom_call.1} parent=43 // pred_region
          %438 = dma.done %s430, 32
        $region60: #{tpu_custom_call.1} parent=43 // pred_fallthru
          _
        %s439 = sand.u32 %s29, 1
        %s440 = scalar_lea.sflag [#allocation9], %s439
        %s441 = sand.u32 %s176, 1
        %s442 = smul.addr %s441, 2
        %s443 = scalar_lea.vmem [#allocation10], %s442
        // Predicated region
        $region61: #{tpu_custom_call.1} parent=43 // pred_check
          %p444 = pneg %p189
        $region62: #{tpu_custom_call.1} parent=43 // pred_check_branch
          %446 = sbr.rel (%p444) target = $region64
        $region63: #{tpu_custom_call.1} parent=43 // pred_region
          %448 = dma.done %s440, 32
        $region64: #{tpu_custom_call.1} parent=43 // pred_fallthru
          _
        %s449 = sand.u32 %s60, 1
        %s450 = scalar_lea.sflag [#allocation3], %s449
        %s451 = sand.u32 %s60, 1
        %s452 = smul.addr %s451, 8
        %s453 = scalar_lea.vmem [#allocation2], %s452
        %p454 = pneg %p73
        %p455 = pneg %p70
        %s456 = sand.u32 %s29, 1
        %s457 = scalar_lea.sflag [#allocation6], %s456
        %s458 = sand.u32 %s90, 1
        %s459 = smul.addr %s458, 8
        %s460 = scalar_lea.vmem [#allocation5], %s459
        %p461 = pneg %p103
        %p462 = pneg %p100
        %s463 = sand.u32 %s29, 1
        %s464 = scalar_lea.sflag [#allocation6], %s463
        %s465 = sand.u32 %s120, 1
        %s466 = smul.addr %s465, 8
        %s467 = scalar_lea.vmem [#allocation7], %s466
        %p468 = pneg %p133
        %p469 = pneg %p130
        %s470 = sand.u32 %s29, 1
        %s471 = scalar_lea.sflag [#allocation9], %s470
        %s472 = sand.u32 %s148, 1
        %s473 = smul.addr %s472, 2
        %s474 = scalar_lea.vmem [#allocation8], %s473
        %p475 = pneg %p161
        %p476 = pneg %p158
        %s477 = sand.u32 %s29, 1
        %s478 = scalar_lea.sflag [#allocation9], %s477
        %s479 = sand.u32 %s176, 1
        %s480 = smul.addr %s479, 2
        %s481 = scalar_lea.vmem [#allocation10], %s480
        %p482 = pneg %p189
        %p483 = pneg %p186
        %s484 = smul.u32 2, %s35
        %p485 = scmp.lt.s32.totalorder %s34, 1
        %s486 = scalar_select %p485, %s34, 1
        %p487 = scmp.lt.s32.totalorder %s484, 1
        %s488 = scalar_select %p487, %s484, 1
        %s489 = smul.addr %s486, 2
        %s490 = sadd.s32 %s488, %s489
        %s491 = scalar_lea.vmem %s5, %s490
        %p492 = pneg %p217
        %p493 = pneg %p214
        %p494 = pneg %p247
        %p495 = pneg %p244
        %s496 = sand.u32 %s234, 1
        %s497 = scalar_lea.sflag [#allocation4], %s496
        %s498 = sand.u32 %s234, 1
        %s499 = smul.addr %s498, 8
        %s500 = scalar_lea.vmem [#allocation11], %s499
        %s501 = smul.u32 2, %s35
        %s502 = smul.u32 2, %s35
        %s503 = smul.u32 2, %s35
        %s504 = smul.u32 2, %s35
        %s505 = smul.u32 2, %s35
        %s506 = smul.u32 2, %s35
        %p507 = scmp.lt.s32.totalorder %s34, 1
        %s508 = scalar_select %p507, %s34, 1
        %p509 = scmp.lt.s32.totalorder %s506, 1
        %s510 = scalar_select %p509, %s506, 1
        %s511 = smul.addr %s508, 2
        %s512 = sadd.s32 %s510, %s511
        %s513 = scalar_lea.vmem %s5, %s512
        %s514 = smul.u32 2, %s35
        %s515 = smul.u32 2, %s35
        %v516 = vld [vmem:[%s403] sm:$0xff]
        %v517 = vld [vmem:[%s433] sm:$0x3]
        %v519 = vperm.slane %v517, 0
        %v520 = vperm.slane %v517, 1
        %v521 = vrot.slane %v520, 4
        %vm522 = vcmask 1043456
        %v523 = vsel %vm522, %v519, %v521
        %v525 = vmul.f32 %v516, %v523
        %v526 = vld [vmem:[%s413] sm:$0xff]
        %v527 = vld [vmem:[%s443] sm:$0x3]
        %v529 = vperm.slane %v527, 0
        %v530 = vperm.slane %v527, 1
        %v531 = vrot.slane %v530, 4
        %v532 = vsel %vm522, %v529, %v531
        %v534 = vmul.f32 %v526, %v532
        %v535 = vadd.f32 %v525, %v534
        %v536 = vld [vmem:[%s423] sm:$0xff]
        %v537 = vld [vmem:[%s513] sm:$0x3]
        %v539 = vperm.slane %v537, 0
        %v540 = vperm.slane %v537, 1
        %v541 = vrot.slane %v540, 4
        %v542 = vsel %vm522, %v539, %v541
        %v544 = vmul.f32 %v536, %v542
        %v545 = vadd.f32 %v535, %v544
        %546 = vst [vmem:[%s500] sm:$0xff] %v545
        %s547 = sand.u32 %s234, 1
        %s548 = scalar_lea.sflag [#allocation4], %s547
        %s549 = sand.u32 %s234, 1
        %s550 = smul.addr %s549, 8
        %s551 = scalar_lea.vmem [#allocation11], %s550
        // Predicated region
        $region65: #{tpu_custom_call.1} parent=43 // pred_check
          %p552 = pneg %p244
        $region66: #{tpu_custom_call.1} parent=43 // pred_check_branch
          %554 = sbr.rel (%p552) target = $region68
        $region67: #{tpu_custom_call.1} parent=43 // pred_region
          %s555 = smul.u32 2, %s35
          %557 = vsyncadd %s548, 0
          %s558 = smul.addr %s36, 2
          %s559 = sadd.s32 %s555, %s558
          %s560 = smul.addr %s34, 2
          %s561 = sadd.s32 %s559, %s560
          %s562 = smul.addr %s561, 4
          %s563 = scalar_lea.hbm %s6, %s562
          %s565 = sshll.u32 %s551, 4
          %s566 = int_to_ptr.vmem [resolvable:$true] %s565
          %s567 = sshll.u32 %s563, 4
          %s568 = int_to_ptr.hbm [resolvable:$true] %s567
          %570 = dma.vmem_to_hbm [thread:$0]  %s566, 128, %s568, %s548
        $region68: #{tpu_custom_call.1} parent=43 // pred_fallthru
          _
      $region44: #{tpu_custom_call.1} parent=5 // pred_fallthru
        _
      %p571 = scmp.le.s32.totalorder 2, %s24
      // Predicated region
      $region69: #{tpu_custom_call.1} parent=5 // pred_check
        %p572 = pneg %p571
      $region70: #{tpu_custom_call.1} parent=5 // pred_check_branch
        %574 = sbr.rel (%p572) target = $region72
      $region71: #{tpu_custom_call.1} parent=5 // pred_region
        %s575 = ssub.s32 %s24, 2
        // Predicated region
        $region73: #{tpu_custom_call.1} parent=71 // pred_check
          %p576 = pneg %p250
        $region74: #{tpu_custom_call.1} parent=71 // pred_check_branch
          %578 = sbr.rel (%p576) target = $region76
        $region75: #{tpu_custom_call.1} parent=71 // pred_region
          %s579 = sand.u32 %s235, 1
          %s580 = scalar_lea.sflag [#allocation4], %s579
          %s581 = sand.u32 %s235, 1
          %s582 = smul.addr %s581, 8
          %s583 = scalar_lea.vmem [#allocation11], %s582
          %585 = dma.done %s580, 128
        $region76: #{tpu_custom_call.1} parent=71 // pred_fallthru
          _
      $region72: #{tpu_custom_call.1} parent=5 // pred_fallthru
        _
    $region6: #{tpu_custom_call.1} parent=1 // loop_footer
      %s28 = sadd.s32 1, %s24
    $region7: #{tpu_custom_call.1} parent=1 // loop_footer_branch
      %23 = sbr.rel target = $region3
    $region8: #{tpu_custom_call.1} parent=1 // loop_exit
      _
    %586 = vsyncpa [#allocation3], 1
    %s587 = scalar_lea.sflag [#allocation3], 1
    %588 = vsyncpa %s587, 1
    %589 = vsyncpa [#allocation6], 1
    %s590 = scalar_lea.sflag [#allocation6], 1
    %591 = vsyncpa %s590, 1
    %592 = vsyncpa [#allocation9], 1
    %s593 = scalar_lea.sflag [#allocation9], 1
    %594 = vsyncpa %s593, 1
    %595 = vsyncpa [#allocation4], 1
    %s596 = scalar_lea.sflag [#allocation4], 1
    %597 = vsyncpa %s596, 1

</llo_original>
